<compile_context>
chip_gen: v5e
topology: v5e:2x2
jax: 0.10.0
libtpu: 0.0.40
codegen_flags: <defaults>
</compile_context>

<pallas_src>
import functools
import math

import jax
import jax.numpy as jnp
from jax.experimental import pallas as pl
from jax.experimental.pallas import tpu as pltpu


_SQRT_2_INV = 1.0 / math.sqrt(2.0)


def _erf_approx(x):
    """erf(x) via Abramowitz & Stegun 7.1.26 (max abs error ~1.5e-7)."""
    a1, a2, a3, a4, a5 = (0.254829592, -0.284496736, 1.421413741,
                          -1.453152027, 1.061405429)
    p = 0.3275911
    sign = jnp.where(x >= 0.0, 1.0, -1.0)
    z = jnp.abs(x)
    t = 1.0 / (1.0 + p * z)
    poly = ((((a5 * t + a4) * t + a3) * t + a2) * t + a1) * t
    return sign * (1.0 - poly * jnp.exp(-z * z))


def _apply_act(h, act):
    if act == "gelu":
        # x * 0.5 * (1 + erf(x / sqrt(2)))  -- exact-gelu semantics
        return h * 0.5 * (1.0 + _erf_approx(h * _SQRT_2_INV))
    if act == "relu":
        return jnp.maximum(h, 0.0)
    if act == "swish":
        return h * jax.nn.sigmoid(h)
    raise ValueError(f"unsupported activation: {act}")


def _head_transform_kernel(x_ref, w_ref, b_ref, g_ref, beta_ref, o_ref,
                           *, eps, act):
    # x_ref: (tm, H)   w_ref: (H, H)   b/g/beta: (1, H)   o_ref: (tm, H)
    x = x_ref[...]
    w = w_ref[...]

    # Dense projection: full-width MXU matmul, f32 accumulation.
    h = jnp.dot(x, w, preferred_element_type=jnp.float32) + b_ref[...]

    # Activation (exact erf-gelu by default).
    h = _apply_act(h, act)

    # LayerNorm over the feature (lane) axis.
    mean = jnp.mean(h, axis=-1, keepdims=True)
    c = h - mean
    var = jnp.mean(c * c, axis=-1, keepdims=True)
    inv = jax.lax.rsqrt(var + eps)
    y = (c * inv) * g_ref[...] + beta_ref[...]

    o_ref[...] = y.astype(o_ref.dtype)


def bert_prediction_head_transform(hidden_states, dense_weight, dense_bias,
                                   ln_gamma, ln_beta, *, eps=1e-12,
                                   hidden_act="gelu"):
    """hidden_states: (..., H). dense_weight: (H, H) in PyTorch (out, in) layout.
       dense_bias / ln_gamma / ln_beta: (H,). Returns (..., H)."""
    orig_shape = hidden_states.shape
    H = orig_shape[-1]
    x = hidden_states.reshape(-1, H)
    M = x.shape[0]

    # Row tiling: pad rows to a sublane multiple; big tiles, tiny grid.
    m8 = ((M + 7) // 8) * 8
    if m8 >= 256:
        tm = 256
        m_pad = ((m8 + tm - 1) // tm) * tm
    else:
        tm = m8
        m_pad = m8
    if m_pad != M:
        x = jnp.pad(x, ((0, m_pad - M), (0, 0)))

    w = dense_weight.T                     # (H_in, H_out) so kernel does x @ w
    b = dense_bias.reshape(1, H)
    g = ln_gamma.reshape(1, H)
    beta = ln_beta.reshape(1, H)

    kernel = functools.partial(_head_transform_kernel,
                               eps=float(eps), act=hidden_act)

    out = pl.pallas_call(
        kernel,
        out_shape=jax.ShapeDtypeStruct((m_pad, H), hidden_states.dtype),
        grid_spec=pltpu.PrefetchScalarGridSpec(
            num_scalar_prefetch=0,
            grid=(m_pad // tm,),
            in_specs=[
                pl.BlockSpec((tm, H), lambda i: (i, 0)),   # activations (row tile)
                pl.BlockSpec((H, H), lambda i: (0, 0)),    # dense weight (resident)
                pl.BlockSpec((1, H), lambda i: (0, 0)),    # dense bias   (resident)
                pl.BlockSpec((1, H), lambda i: (0, 0)),    # LN gamma     (resident)
                pl.BlockSpec((1, H), lambda i: (0, 0)),    # LN beta      (resident)
            ],
            out_specs=pl.BlockSpec((tm, H), lambda i: (i, 0)),  # lane-dense output
        ),
        compiler_params=pltpu.CompilerParams(
            dimension_semantics=("parallel",)),
    )(x, w, b, g, beta)

    return out[:M].reshape(orig_shape)


def _reference(hidden_states, dense_weight, dense_bias, ln_gamma, ln_beta,
               eps=1e-12):
    h = hidden_states @ dense_weight.T + dense_bias
    h = h * 0.5 * (1.0 + jax.scipy.special.erf(h / math.sqrt(2.0)))   # exact gelu
    mean = h.mean(-1, keepdims=True)
    var = ((h - mean) ** 2).mean(-1, keepdims=True)
    return ln_gamma * (h - mean) / jnp.sqrt(var + eps) + ln_beta


if __name__ == "__main__":
    # Small config consistent with the module: hidden_size=128, eps=1e-12, gelu.
    B, S, H = 2, 8, 128
    eps = 1e-12

    key = jax.random.PRNGKey(0)
    ks = jax.random.split(key, 5)
    hidden_states = jax.random.normal(ks[0], (B, S, H), dtype=jnp.float32)
    dense_weight = jax.random.normal(ks[1], (H, H), dtype=jnp.float32) * 0.05
    dense_bias = jax.random.normal(ks[2], (H,), dtype=jnp.float32) * 0.01
    ln_gamma = 1.0 + jax.random.normal(ks[3], (H,), dtype=jnp.float32) * 0.05
    ln_beta = jax.random.normal(ks[4], (H,), dtype=jnp.float32) * 0.05

    out = bert_prediction_head_transform(hidden_states, dense_weight, dense_bias,
                                         ln_gamma, ln_beta, eps=eps,
                                         hidden_act="gelu")
    out = jax.block_until_ready(out)

    ref = _reference(hidden_states, dense_weight, dense_bias, ln_gamma, ln_beta,
                     eps=eps)
    assert out.shape == (B, S, H)
    assert jnp.allclose(out, ref, atol=1e-4, rtol=1e-4), "mismatch vs reference"

    print("KERNEL_OK")
</pallas_src>

<mosaic_0001>
module attributes {stable_mosaic.version = 11 : i64} {
  func.func @_head_transform_kernel(%arg0: i32, %arg1: memref<16x128xf32, #tpu.memory_space<vmem>>, %arg2: memref<128x128xf32, #tpu.memory_space<vmem>>, %arg3: memref<1x128xf32, #tpu.memory_space<vmem>>, %arg4: memref<1x128xf32, #tpu.memory_space<vmem>>, %arg5: memref<1x128xf32, #tpu.memory_space<vmem>>, %arg6: memref<16x128xf32, #tpu.memory_space<vmem>>) attributes {dimension_semantics = [#tpu.dimension_semantics<parallel>], iteration_bounds = array<i64: 1>, scalar_prefetch = 0 : i64, scratch_operands = 0 : i64, tpu.core_type = #tpu.core_type<tc>, window_params = [{transform_indices = @transform_0, window_bounds = array<i64: 16, 128>}, {pipeline_mode = #tpu.pipeline_mode<synchronous>, transform_indices = @transform_1, window_bounds = array<i64: 128, 128>}, {pipeline_mode = #tpu.pipeline_mode<synchronous>, transform_indices = @transform_2, window_bounds = array<i64: 1, 128>}, {pipeline_mode = #tpu.pipeline_mode<synchronous>, transform_indices = @transform_3, window_bounds = array<i64: 1, 128>}, {pipeline_mode = #tpu.pipeline_mode<synchronous>, transform_indices = @transform_4, window_bounds = array<i64: 1, 128>}, {transform_indices = @transform_5, window_bounds = array<i64: 16, 128>}]} {
    %c0 = arith.constant 0 : index
    %c0_0 = arith.constant 0 : index
    %0 = vector.load %arg1[%c0, %c0_0] : memref<16x128xf32, #tpu.memory_space<vmem>>, vector<16x128xf32>
    %c0_1 = arith.constant 0 : index
    %c0_2 = arith.constant 0 : index
    %1 = vector.load %arg2[%c0_1, %c0_2] : memref<128x128xf32, #tpu.memory_space<vmem>>, vector<128x128xf32>
    %cst = arith.constant dense<0.000000e+00> : vector<16x128xf32>
    %2 = tpu.matmul %0, %1, %cst {dimension_numbers = #tpu.dot_dimension_numbers<[1], [0], [0], [1], [0, 0, 1, 1], [], []>} : vector<16x128xf32>, vector<128x128xf32>, vector<16x128xf32> -> vector<16x128xf32>
    %c0_3 = arith.constant 0 : index
    %c0_4 = arith.constant 0 : index
    %3 = vector.load %arg3[%c0_3, %c0_4] : memref<1x128xf32, #tpu.memory_space<vmem>>, vector<1x128xf32>
    %4 = vector.broadcast %3 : vector<1x128xf32> to vector<16x128xf32>
    %5 = arith.addf %2, %4 : vector<16x128xf32>
    %cst_5 = arith.constant 5.000000e-01 : f32
    %6 = vector.broadcast %cst_5 : f32 to vector<16x128xf32>
    %7 = arith.mulf %5, %6 : vector<16x128xf32>
    %cst_6 = arith.constant 0.707106769 : f32
    %8 = vector.broadcast %cst_6 : f32 to vector<16x128xf32>
    %9 = arith.mulf %5, %8 : vector<16x128xf32>
    %cst_7 = arith.constant 0.000000e+00 : f32
    %10 = vector.broadcast %cst_7 : f32 to vector<16x128xf32>
    %11 = arith.cmpf oge, %9, %10 : vector<16x128xf32>
    %cst_8 = arith.constant 1.000000e+00 : f32
    %cst_9 = arith.constant -1.000000e+00 : f32
    %12 = vector.broadcast %cst_8 : f32 to vector<16x128xf32>
    %13 = vector.broadcast %cst_9 : f32 to vector<16x128xf32>
    %14 = arith.select %11, %12, %13 : vector<16x128xi1>, vector<16x128xf32>
    %15 = math.absf %9 : vector<16x128xf32>
    %cst_10 = arith.constant 0.327591091 : f32
    %16 = vector.broadcast %cst_10 : f32 to vector<16x128xf32>
    %17 = arith.mulf %16, %15 : vector<16x128xf32>
    %cst_11 = arith.constant 1.000000e+00 : f32
    %18 = vector.broadcast %cst_11 : f32 to vector<16x128xf32>
    %19 = arith.addf %18, %17 : vector<16x128xf32>
    %cst_12 = arith.constant 1.000000e+00 : f32
    %20 = vector.broadcast %cst_12 : f32 to vector<16x128xf32>
    %21 = arith.divf %20, %19 : vector<16x128xf32>
    %cst_13 = arith.constant 1.06140542 : f32
    %22 = vector.broadcast %cst_13 : f32 to vector<16x128xf32>
    %23 = arith.mulf %22, %21 : vector<16x128xf32>
    %cst_14 = arith.constant -1.45315206 : f32
    %24 = vector.broadcast %cst_14 : f32 to vector<16x128xf32>
    %25 = arith.addf %23, %24 : vector<16x128xf32>
    %26 = arith.mulf %25, %21 : vector<16x128xf32>
    %cst_15 = arith.constant 1.42141378 : f32
    %27 = vector.broadcast %cst_15 : f32 to vector<16x128xf32>
    %28 = arith.addf %26, %27 : vector<16x128xf32>
    %29 = arith.mulf %28, %21 : vector<16x128xf32>
    %cst_16 = arith.constant -0.284496725 : f32
    %30 = vector.broadcast %cst_16 : f32 to vector<16x128xf32>
    %31 = arith.addf %29, %30 : vector<16x128xf32>
    %32 = arith.mulf %31, %21 : vector<16x128xf32>
    %cst_17 = arith.constant 0.254829586 : f32
    %33 = vector.broadcast %cst_17 : f32 to vector<16x128xf32>
    %34 = arith.addf %32, %33 : vector<16x128xf32>
    %35 = arith.mulf %34, %21 : vector<16x128xf32>
    %cst_18 = arith.constant 0.000000e+00 : f32
    %36 = vector.broadcast %cst_18 : f32 to vector<16x128xf32>
    %37 = arith.subf %36, %15 : vector<16x128xf32>
    %38 = arith.mulf %37, %15 : vector<16x128xf32>
    %39 = math.exp %38 : vector<16x128xf32>
    %40 = arith.mulf %35, %39 : vector<16x128xf32>
    %cst_19 = arith.constant 1.000000e+00 : f32
    %41 = vector.broadcast %cst_19 : f32 to vector<16x128xf32>
    %42 = arith.subf %41, %40 : vector<16x128xf32>
    %43 = arith.mulf %14, %42 : vector<16x128xf32>
    %cst_20 = arith.constant 1.000000e+00 : f32
    %44 = vector.broadcast %cst_20 : f32 to vector<16x128xf32>
    %45 = arith.addf %44, %43 : vector<16x128xf32>
    %46 = arith.mulf %7, %45 : vector<16x128xf32>
    %cst_21 = arith.constant dense<0.000000e+00> : vector<16xf32>
    %47 = vector.multi_reduction <add>, %46, %cst_21 [1] : vector<16x128xf32> to vector<16xf32>
    %48 = vector.shape_cast %47 : vector<16xf32> to vector<16x1xf32>
    %cst_22 = arith.constant 1.280000e+02 : f32
    %49 = vector.broadcast %cst_22 : f32 to vector<16x1xf32>
    %50 = arith.divf %48, %49 : vector<16x1xf32>
    %51 = vector.broadcast %50 : vector<16x1xf32> to vector<16x128xf32>
    %52 = arith.subf %46, %51 : vector<16x128xf32>
    %53 = arith.mulf %52, %52 : vector<16x128xf32>
    %cst_23 = arith.constant dense<0.000000e+00> : vector<16xf32>
    %54 = vector.multi_reduction <add>, %53, %cst_23 [1] : vector<16x128xf32> to vector<16xf32>
    %55 = vector.shape_cast %54 : vector<16xf32> to vector<16x1xf32>
    %cst_24 = arith.constant 1.280000e+02 : f32
    %56 = vector.broadcast %cst_24 : f32 to vector<16x1xf32>
    %57 = arith.divf %55, %56 : vector<16x1xf32>
    %cst_25 = arith.constant 9.99999996E-13 : f32
    %58 = vector.broadcast %cst_25 : f32 to vector<16x1xf32>
    %59 = arith.addf %57, %58 : vector<16x1xf32>
    %60 = math.rsqrt %59 : vector<16x1xf32>
    %61 = vector.broadcast %60 : vector<16x1xf32> to vector<16x128xf32>
    %62 = arith.mulf %52, %61 : vector<16x128xf32>
    %c0_26 = arith.constant 0 : index
    %c0_27 = arith.constant 0 : index
    %63 = vector.load %arg4[%c0_26, %c0_27] : memref<1x128xf32, #tpu.memory_space<vmem>>, vector<1x128xf32>
    %64 = vector.broadcast %63 : vector<1x128xf32> to vector<16x128xf32>
    %65 = arith.mulf %62, %64 : vector<16x128xf32>
    %c0_28 = arith.constant 0 : index
    %c0_29 = arith.constant 0 : index
    %66 = vector.load %arg5[%c0_28, %c0_29] : memref<1x128xf32, #tpu.memory_space<vmem>>, vector<1x128xf32>
    %67 = vector.broadcast %66 : vector<1x128xf32> to vector<16x128xf32>
    %68 = arith.addf %65, %67 : vector<16x128xf32>
    %c0_30 = arith.constant 0 : index
    %c0_31 = arith.constant 0 : index
    %69 = vector.load %arg6[%c0_30, %c0_31] : memref<16x128xf32, #tpu.memory_space<vmem>>, vector<16x128xf32>
    tpu.vector_store %arg6[%c0_30, %c0_31], %68 {strides = array<i32>} : memref<16x128xf32, #tpu.memory_space<vmem>>, vector<16x128xf32>,
    return
  }
  func.func @transform_0(%arg0: i32) -> (i32, i32) {
    %c0_i32 = arith.constant 0 : i32
    %c0_i32_0 = arith.constant 0 : i32
    return %arg0, %c0_i32 : i32, i32
  }
  func.func @transform_1(%arg0: i32) -> (i32, i32) {
    %c0_i32 = arith.constant 0 : i32
    %c0_i32_0 = arith.constant 0 : i32
    %c0_i32_1 = arith.constant 0 : i32
    return %c0_i32, %c0_i32_0 : i32, i32
  }
  func.func @transform_2(%arg0: i32) -> (i32, i32) {
    %c0_i32 = arith.constant 0 : i32
    %c0_i32_0 = arith.constant 0 : i32
    %c0_i32_1 = arith.constant 0 : i32
    return %c0_i32, %c0_i32_0 : i32, i32
  }
  func.func @transform_3(%arg0: i32) -> (i32, i32) {
    %c0_i32 = arith.constant 0 : i32
    %c0_i32_0 = arith.constant 0 : i32
    %c0_i32_1 = arith.constant 0 : i32
    return %c0_i32, %c0_i32_0 : i32, i32
  }
  func.func @transform_4(%arg0: i32) -> (i32, i32) {
    %c0_i32 = arith.constant 0 : i32
    %c0_i32_0 = arith.constant 0 : i32
    %c0_i32_1 = arith.constant 0 : i32
    return %c0_i32, %c0_i32_0 : i32, i32
  }
  func.func @transform_5(%arg0: i32) -> (i32, i32) {
    %c0_i32 = arith.constant 0 : i32
    %c0_i32_0 = arith.constant 0 : i32
    return %arg0, %c0_i32 : i32, i32
  }
}

</mosaic_0001>

<llo_original>
// kernel: tpu_custom_call.1
$region0: #{tpu_custom_call.1}
  #allocation0 [shape = 'u32[]', space=smem, size = 0x4, offset = 0x4, fixed_abs, tag = 'smem constant byte address 0x4 - core index']
  #allocation1 [shape = 'u32[72,128]{1,0:T(1,128)}', space=vmem, size = 0x9000, scoped, tag = 'internal scratch']
  %s0 = inlined_call_operand.hbm [shape: f32[16,128], index: 0, kind: input, shape index: {}]
  %s1 = inlined_call_operand.hbm [shape: f32[128,128], index: 1, kind: input, shape index: {}]
  %s2 = inlined_call_operand.vmem [shape: f32[1,128], index: 2, kind: input, shape index: {}]
  %s3 = inlined_call_operand.vmem [shape: f32[1,128], index: 3, kind: input, shape index: {}]
  %s4 = inlined_call_operand.vmem [shape: f32[1,128], index: 4, kind: input, shape index: {}]
  %s5 = inlined_call_operand.hbm [shape: f32[16,128], index: 5, kind: output, shape index: {}]
  %s6 = sld [smem:[#allocation0]]
  $region38: #{tpu_custom_call.1} parent=0
    _
  %s8 = ssub.s32 1, %s6
  %s9 = scalar_select 0, %s8, %s6
  $region1: #{tpu_custom_call.1} parent=0
    #allocation2 [shape = 'u8[8192]{0}', space=vmem, size = 0x2000, scoped, tag = 'input window, operand 0, single buffered']
    #allocation3 [shape = 's32[1]{0}', space=sflag, size = 0x4, scoped, tag = 'scoped memory for tpu_custom_call.1']
    #allocation4 [shape = 's32[1]{0}', space=sflag, size = 0x4, scoped, tag = 'scoped memory for tpu_custom_call.1']
    #allocation5 [shape = 'u8[65536]{0}', space=vmem, size = 0x10000, scoped, tag = 'input window, operand 1, single buffered']
    #allocation6 [shape = 's32[1]{0}', space=sflag, size = 0x4, scoped, tag = 'scoped memory for tpu_custom_call.1']
    #allocation7 [shape = 'u8[8192]{0}', space=vmem, size = 0x2000, scoped, tag = 'output window, operand 0, single buffered']
    %10 = vsyncpa [#allocation3], 0
    %11 = vsyncpa [#allocation6], 0
    %12 = vsyncpa [#allocation4], 0
    // Predicated region
    $region2: #{tpu_custom_call.1} parent=1 // pred_check
      _
    $region3: #{tpu_custom_call.1} parent=1 // pred_check_branch
      %14 = sbr.rel (0) target = $region5
    $region4: #{tpu_custom_call.1} parent=1 // pred_region
      %16 = vsyncadd [#allocation3], 0
      %s17 = sshll.u32 %s0, 4
      %s18 = int_to_ptr.hbm [resolvable:$true] %s17
      %s19 = sshll.u32 [#allocation2], 4
      %s20 = int_to_ptr.vmem [resolvable:$true] %s19
      %25 = dma.hbm_to_vmem [thread:$0]  %s18, 256, %s20, [#allocation3], 128, 128, 8
    $region5: #{tpu_custom_call.1} parent=1 // pred_fallthru
      _
    // Predicated region
    $region6: #{tpu_custom_call.1} parent=1 // pred_check
      _
    $region7: #{tpu_custom_call.1} parent=1 // pred_check_branch
      %27 = sbr.rel (0) target = $region9
    $region8: #{tpu_custom_call.1} parent=1 // pred_region
      %29 = vsyncadd [#allocation6], 0
      %s30 = sshll.u32 %s1, 4
      %s31 = int_to_ptr.hbm [resolvable:$true] %s30
      %s32 = sshll.u32 [#allocation5], 4
      %s33 = int_to_ptr.vmem [resolvable:$true] %s32
      %38 = dma.hbm_to_vmem [thread:$0]  %s31, 2048, %s33, [#allocation6], 128, 128, 8
    $region9: #{tpu_custom_call.1} parent=1 // pred_fallthru
      _
    // Predicated region
    $region10: #{tpu_custom_call.1} parent=1 // pred_check
      _
    $region11: #{tpu_custom_call.1} parent=1 // pred_check_branch
      %40 = sbr.rel (0) target = $region13
    $region12: #{tpu_custom_call.1} parent=1 // pred_region
      _
    $region13: #{tpu_custom_call.1} parent=1 // pred_fallthru
      _
    // Predicated region
    $region14: #{tpu_custom_call.1} parent=1 // pred_check
      _
    $region15: #{tpu_custom_call.1} parent=1 // pred_check_branch
      %42 = sbr.rel (0) target = $region17
    $region16: #{tpu_custom_call.1} parent=1 // pred_region
      _
    $region17: #{tpu_custom_call.1} parent=1 // pred_fallthru
      _
    // Predicated region
    $region18: #{tpu_custom_call.1} parent=1 // pred_check
      _
    $region19: #{tpu_custom_call.1} parent=1 // pred_check_branch
      %44 = sbr.rel (0) target = $region21
    $region20: #{tpu_custom_call.1} parent=1 // pred_region
      _
    $region21: #{tpu_custom_call.1} parent=1 // pred_fallthru
      _
    // Predicated region
    $region22: #{tpu_custom_call.1} parent=1 // pred_check
      _
    $region23: #{tpu_custom_call.1} parent=1 // pred_check_branch
      %46 = sbr.rel (0) target = $region25
    $region24: #{tpu_custom_call.1} parent=1 // pred_region
      %48 = dma.done [#allocation3], 256
    $region25: #{tpu_custom_call.1} parent=1 // pred_fallthru
      _
    // Predicated region
    $region26: #{tpu_custom_call.1} parent=1 // pred_check
      _
    $region27: #{tpu_custom_call.1} parent=1 // pred_check_branch
      %50 = sbr.rel (0) target = $region29
    $region28: #{tpu_custom_call.1} parent=1 // pred_region
      %52 = dma.done [#allocation6], 2048
    $region29: #{tpu_custom_call.1} parent=1 // pred_fallthru
      _
    %v53 = vld [vmem:[#allocation2] sm:$0xff]
    %v54 = vld [vmem:[#allocation2 + $0x8] sm:$0xff]
    %v55 = vld [vmem:[#allocation5] sm:$0xff]
    %v56 = vld [vmem:[#allocation5 + $0x8] sm:$0xff]
    %v57 = vld [vmem:[#allocation5 + $0x10] sm:$0xff]
    %v58 = vld [vmem:[#allocation5 + $0x18] sm:$0xff]
    %v59 = vld [vmem:[#allocation5 + $0x20] sm:$0xff]
    %v60 = vld [vmem:[#allocation5 + $0x28] sm:$0xff]
    %v61 = vld [vmem:[#allocation5 + $0x30] sm:$0xff]
    %v62 = vld [vmem:[#allocation5 + $0x38] sm:$0xff]
    %v63 = vld [vmem:[#allocation5 + $0x40] sm:$0xff]
    %v64 = vld [vmem:[#allocation5 + $0x48] sm:$0xff]
    %v65 = vld [vmem:[#allocation5 + $0x50] sm:$0xff]
    %v66 = vld [vmem:[#allocation5 + $0x58] sm:$0xff]
    %v67 = vld [vmem:[#allocation5 + $0x60] sm:$0xff]
    %v68 = vld [vmem:[#allocation5 + $0x68] sm:$0xff]
    %v69 = vld [vmem:[#allocation5 + $0x70] sm:$0xff]
    %v70 = vld [vmem:[#allocation5 + $0x78] sm:$0xff]
    %v71 = vld [vmem:[%s2] sm:$0x1]
    %v73 = vperm.slane %v71, 0
    %75 = vmatpush.msra.mxu0 %v70
    %76 = vmatpush.msra.mxu0 %v69
    %77 = vmatpush.msra.mxu0 %v68
    %78 = vmatpush.msra.mxu0 %v67
    %79 = vmatpush.msra.mxu0 %v66
    %80 = vmatpush.msra.mxu0 %v65
    %81 = vmatpush.msra.mxu0 %v64
    %82 = vmatpush.msra.mxu0 %v63
    %83 = vmatpush.msra.mxu0 %v62
    %84 = vmatpush.msra.mxu0 %v61
    %85 = vmatpush.msra.mxu0 %v60
    %86 = vmatpush.msra.mxu0 %v59
    %87 = vmatpush.msra.mxu0 %v58
    %88 = vmatpush.msra.mxu0 %v57
    %89 = vmatpush.msra.mxu0 %v56
    %90 = vmatpush.msra.mxu0 %v55
    %91 = vmatmul.f32.gmra.mxu0 %v53
    %v92 = vpop.f32.mrf.mxu0
    %v93 = vadd.f32 %v73, %v92
    %94 = vmatmul.f32.gmra.mxu0 %v54
    %v95 = vpop.f32.mrf.mxu0
    %v96 = vadd.f32 %v73, %v95
    %97 = vdwg.mxu0
    %v98 = vmul.f32 %v93, 0.5
    %v99 = vmul.f32 %v96, 0.5
    %v100 = vmul.f32 %v93, 0.70710677
    %v101 = vmul.f32 %v96, 0.70710677
    %vm102 = vcmp.ge.f32.partialorder %v100, 0.0
    %vm103 = vcmp.ge.f32.partialorder %v101, 0.0
    %v104 = vsel %vm102, 1.0, -1.0
    %v105 = vsel %vm103, 1.0, -1.0
    %v106 = vand.u32 2147483647, %v100
    %v107 = vand.u32 2147483647, %v101
    %v108 = vmul.f32 %v106, 0.3275911
    %v109 = vmul.f32 %v107, 0.3275911
    %v110 = vadd.f32 %v108, 1.0
    %v111 = vadd.f32 %v109, 1.0
    %v112 = vrcp.pop %v110
    %v113 = vmul.f32 %v110, %v112
    %v114 = vsub.f32 1.0, %v113
    %v115 = vmul.f32 %v112, %v114
    %v116 = vadd.f32 %v112, %v115
    %vm117 = vweird.f32 %v110
    %vm118 = vweird.f32 %v112
    %vm119 = vmor %vm117, %vm118
    %v120 = vsel %vm119, %v112, %v116
    %v121 = vand.u32 2147483647, %v110
    %vm122 = vcmp.eq.f32.partialorder %v121, 8.507059e+37
    %v123 = vand.u32 %v110, 2147483648
    %v124 = vor.u32 1.1754944e-38, %v123
    %v125 = vsel %vm122, %v124, %v120
    %v126 = vmul.f32 1.0, %v125
    %v127 = vrcp.pop %v111
    %v128 = vmul.f32 %v111, %v127
    %v129 = vsub.f32 1.0, %v128
    %v130 = vmul.f32 %v127, %v129
    %v131 = vadd.f32 %v127, %v130
    %vm132 = vweird.f32 %v111
    %vm133 = vweird.f32 %v127
    %vm134 = vmor %vm132, %vm133
    %v135 = vsel %vm134, %v127, %v131
    %v136 = vand.u32 2147483647, %v111
    %vm137 = vcmp.eq.f32.partialorder %v136, 8.507059e+37
    %v138 = vand.u32 %v111, 2147483648
    %v139 = vor.u32 1.1754944e-38, %v138
    %v140 = vsel %vm137, %v139, %v135
    %v141 = vmul.f32 1.0, %v140
    %v142 = vmul.f32 %v126, 1.0614054
    %v143 = vmul.f32 %v141, 1.0614054
    %v144 = vadd.f32 %v142, -1.4531521
    %v145 = vadd.f32 %v143, -1.4531521
    %v146 = vmul.f32 %v144, %v126
    %v147 = vmul.f32 %v145, %v141
    %v148 = vadd.f32 %v146, 1.4214138
    %v149 = vadd.f32 %v147, 1.4214138
    %v150 = vmul.f32 %v148, %v126
    %v151 = vmul.f32 %v149, %v141
    %v152 = vadd.f32 %v150, -0.28449672
    %v153 = vadd.f32 %v151, -0.28449672
    %v154 = vmul.f32 %v152, %v126
    %v155 = vmul.f32 %v153, %v141
    %v156 = vadd.f32 %v154, 0.2548296
    %v157 = vadd.f32 %v155, 0.2548296
    %v158 = vmul.f32 %v156, %v126
    %v159 = vmul.f32 %v157, %v141
    %v160 = vsub.f32 0.0, %v106
    %v161 = vsub.f32 0.0, %v107
    %v162 = vmul.f32 %v160, %v106
    %v163 = vmul.f32 %v161, %v107
    %v164 = vmul.f32 %v162, 1.442695
    %v165 = vpow.pop %v164
    %v166 = vmul.f32 %v163, 1.442695
    %v167 = vpow.pop %v166
    %v168 = vmul.f32 %v158, %v165
    %v169 = vmul.f32 %v159, %v167
    %v170 = vsub.f32 1.0, %v168
    %v171 = vsub.f32 1.0, %v169
    %v172 = vmul.f32 %v104, %v170
    %v173 = vmul.f32 %v105, %v171
    %v174 = vadd.f32 %v172, 1.0
    %v175 = vadd.f32 %v173, 1.0
    %v176 = vmul.f32 %v98, %v174
    %v177 = vmul.f32 %v99, %v175
    %178 = vadd.xlane.f32.xlu0 %v176
    %v179 = vpop.xlane.xlu0 %178
    %180 = vadd.xlane.f32.xlu0 %v177
    %v181 = vpop.xlane.xlu0 %180
    %v182 = vrcp.pop 128.0
    %v183 = vmul.f32 128.0, %v182
    %v184 = vsub.f32 1.0, %v183
    %v185 = vmul.f32 %v182, %v184
    %v186 = vadd.f32 %v182, %v185
    %vm187 = vweird.f32 %v182
    %v188 = vsel %vm187, %v182, %v186
    %v189 = vmul.f32 %v179, %v188
    %v190 = vmul.f32 %v181, %v188
    %v191 = vsub.f32 %v176, %v189
    %v192 = vsub.f32 %v177, %v190
    %v193 = vmul.f32 %v191, %v191
    %v194 = vmul.f32 %v192, %v192
    %195 = vadd.xlane.f32.xlu0 %v193
    %v196 = vpop.xlane.xlu0 %195
    %197 = vadd.xlane.f32.xlu0 %v194
    %v198 = vpop.xlane.xlu0 %197
    %v199 = vmul.f32 %v196, %v188
    %v200 = vmul.f32 %v198, %v188
    %v201 = vadd.f32 %v199, 1e-12
    %v202 = vadd.f32 %v200, 1e-12
    %v203 = vrsqrt.pop %v201
    %v204 = vmul.f32 %v203, %v201
    %v205 = vmul.f32 %v204, %v203
    %v206 = vmul.f32 0.5, %v205
    %v207 = vsub.f32 1.5, %v206
    %v208 = vmul.f32 %v203, %v207
    %vm209 = vweird.f32 %v201
    %vm210 = vweird.f32 %v203
    %vm211 = vmor %vm209, %vm210
    %v212 = vsel %vm211, %v203, %v208
    %v213 = vrsqrt.pop %v202
    %v214 = vmul.f32 %v213, %v202
    %v215 = vmul.f32 %v214, %v213
    %v216 = vmul.f32 0.5, %v215
    %v217 = vsub.f32 1.5, %v216
    %v218 = vmul.f32 %v213, %v217
    %vm219 = vweird.f32 %v202
    %vm220 = vweird.f32 %v213
    %vm221 = vmor %vm219, %vm220
    %v222 = vsel %vm221, %v213, %v218
    %v223 = vmul.f32 %v191, %v212
    %v224 = vmul.f32 %v192, %v222
    %v225 = vld [vmem:[%s3] sm:$0x1]
    %v227 = vperm.slane %v225, 0
    %v229 = vmul.f32 %v223, %v227
    %v230 = vmul.f32 %v224, %v227
    %v231 = vld [vmem:[%s4] sm:$0x1]
    %v233 = vperm.slane %v231, 0
    %v235 = vadd.f32 %v229, %v233
    %v236 = vadd.f32 %v230, %v233
    %237 = vst [vmem:[#allocation7] sm:$0xff] %v235
    %238 = vst [vmem:[#allocation7 + $0x8] sm:$0xff] %v236
    // Predicated region
    $region30: #{tpu_custom_call.1} parent=1 // pred_check
      _
    $region31: #{tpu_custom_call.1} parent=1 // pred_check_branch
      %240 = sbr.rel (0) target = $region33
    $region32: #{tpu_custom_call.1} parent=1 // pred_region
      %242 = vsyncadd [#allocation4], 0
      %s243 = sshll.u32 [#allocation7], 4
      %s244 = int_to_ptr.vmem [resolvable:$true] %s243
      %s245 = sshll.u32 %s5, 4
      %s246 = int_to_ptr.hbm [resolvable:$true] %s245
      %251 = dma.vmem_to_hbm [thread:$0]  %s244, 256, %s246, [#allocation4], 128, 128, 8
    $region33: #{tpu_custom_call.1} parent=1 // pred_fallthru
      _
    // Predicated region
    $region34: #{tpu_custom_call.1} parent=1 // pred_check
      _
    $region35: #{tpu_custom_call.1} parent=1 // pred_check_branch
      %253 = sbr.rel (0) target = $region37
    $region36: #{tpu_custom_call.1} parent=1 // pred_region
      %255 = dma.done [#allocation4], 256
    $region37: #{tpu_custom_call.1} parent=1 // pred_fallthru
      _
    %256 = vsyncpa [#allocation3], 1
    %257 = vsyncpa [#allocation6], 1
    %258 = vsyncpa [#allocation4], 1

</llo_original>
